<compile_context>
chip_gen: v6e
topology: v6e:2x2x1
jax: 0.10.0
libtpu: 0.0.40
codegen_flags: <defaults>
</compile_context>

<pallas_src>
import functools

import jax
import jax.numpy as jnp
from jax import lax
from jax.experimental import pallas as pl
from jax.experimental.pallas import tpu as pltpu


def _ce_partial_sum_kernel(logits_ref, targets_ref, out_ref, acc_ref, *,
                           n_rows, tile_n, tiles_per_core):
    """Accumulate the sum of per-row cross-entropy over one (tile_n, C) row block."""
    p = pl.program_id(0)   # core-split axis ("parallel")
    i = pl.program_id(1)   # row-tile reduction axis ("arbitrary")

    @pl.when(i == 0)
    def _():
        acc_ref[...] = jnp.zeros_like(acc_ref)

    x = logits_ref[...].astype(jnp.float32)               # (tile_n, C)
    t = targets_ref[...]                                   # (tile_n, 1) int32

    # numerically-stable logsumexp along the class (lane) axis
    m = jnp.max(x, axis=-1, keepdims=True)                 # (tile_n, 1)
    lse = m + jnp.log(jnp.sum(jnp.exp(x - m), axis=-1, keepdims=True))

    # gather x[target] with a one-hot compare + lane reduction (no logp materialized)
    col = lax.broadcasted_iota(jnp.int32, x.shape, 1)       # (tile_n, C)
    x_t = jnp.sum(jnp.where(col == t, x, 0.0), axis=-1, keepdims=True)

    per_row = lse - x_t                                     # (tile_n, 1) = -log softmax[target]

    # mask rows past the true N (last partial tile / clamped out-of-range logical tiles);
    # masked rows may hold inf/nan from padded garbage, but where() discards them.
    blk = p * tiles_per_core + i
    row = blk * tile_n + lax.broadcasted_iota(jnp.int32, per_row.shape, 0)
    per_row = jnp.where(row < n_rows, per_row, 0.0)

    acc_ref[...] += jnp.sum(per_row)

    @pl.when(i == tiles_per_core - 1)
    def _():
        out_ref[...] = acc_ref[...]


def inner_loss(inner_product, patch_targets, tile_n=None):
    """Pallas equivalent of InnerLoss.forward.

    inner_product: (N, C) float logits
    patch_targets: (N,) integer class indices in [0, C)
    returns: scalar float32 mean cross-entropy loss
    """
    n, c = inner_product.shape
    targets_2d = patch_targets.astype(jnp.int32).reshape(n, 1)
    itemsize = jnp.dtype(inner_product.dtype).itemsize

    # Row-tile sizing: aim for a few MiB per logits tile (near HBM roofline, safe for
    # double-buffering in every generation's scoped VMEM).
    if tile_n is None:
        cap = (4 * 1024 * 1024) // max(c * itemsize, 1)
        cap = max(8, min(1024, (cap // 8) * 8))
        tile_n = n if n <= cap else cap
    nblocks = pl.cdiv(n, tile_n)

    # 2-way core split for v7x megacore; degenerates gracefully on single-TC chips.
    n_split = 2 if nblocks >= 2 else 1
    tiles_per_core = pl.cdiv(nblocks, n_split)

    def blk_map(p, i):
        # Clamp so fully out-of-range logical blocks re-read the last real block;
        # their rows are masked out inside the kernel, so the result is unaffected.
        return (jnp.minimum(p * tiles_per_core + i, nblocks - 1), 0)

    kernel = functools.partial(
        _ce_partial_sum_kernel,
        n_rows=n, tile_n=tile_n, tiles_per_core=tiles_per_core)

    tile_bytes = tile_n * c * itemsize
    cp_kwargs = dict(dimension_semantics=("parallel", "arbitrary"))
    est_vmem = 4 * tile_bytes + (1 << 20)        # 2 inputs x double buffer + slack
    if est_vmem > 12 * 1024 * 1024:              # only raise the limit when large tiles need it
        cp_kwargs["vmem_limit_bytes"] = int(min(48 * 1024 * 1024, 2 * est_vmem))

    partial = pl.pallas_call(
        kernel,
        out_shape=jax.ShapeDtypeStruct((n_split, 8, 128), jnp.float32),
        grid_spec=pltpu.PrefetchScalarGridSpec(
            num_scalar_prefetch=0,
            grid=(n_split, tiles_per_core),
            in_specs=[
                pl.BlockSpec((tile_n, c), blk_map),   # logits tile
                pl.BlockSpec((tile_n, 1), blk_map),   # target indices tile
            ],
            out_specs=pl.BlockSpec((1, 8, 128), lambda p, i: (p, 0, 0)),
            scratch_shapes=[pltpu.VMEM((1, 8, 128), jnp.float32)],
        ),
        compiler_params=pltpu.CompilerParams(**cp_kwargs),
    )(inner_product, targets_2d)

    # Finish the mean: one add per core partial, divided by the true N.
    return jnp.sum(partial[:, 0, 0]) / n


if __name__ == "__main__":
    key = jax.random.PRNGKey(0)
    k1, k2 = jax.random.split(key)

    # small shapes consistent with the module: N patches, C classes
    N, C = 64, 32
    inner_product = jax.random.normal(k1, (N, C), dtype=jnp.float32)
    patch_targets = jax.random.randint(k2, (N,), 0, C, dtype=jnp.int32)

    # plain-JAX reference (same math as F.cross_entropy, reduction='mean')
    logp_ref = jax.nn.log_softmax(inner_product, axis=-1)
    ref = -jnp.mean(jnp.take_along_axis(logp_ref, patch_targets[:, None], axis=-1))

    # Two configurations only (keeps compile time short):
    #   None -> single-block fast path
    #   24   -> multi-tile reduction + core split + partial last tile + clamped block
    for tile in (None, 24):
        loss = jax.block_until_ready(inner_loss(inner_product, patch_targets, tile_n=tile))
        assert jnp.allclose(loss, ref, atol=1e-5, rtol=1e-5), (tile, loss, ref)

    print("KERNEL_OK")
</pallas_src>

<mosaic_0001>
module attributes {stable_mosaic.version = 11 : i64} {
  func.func @_ce_partial_sum_kernel(%arg0: i32, %arg1: i32, %arg2: memref<64x32xf32, #tpu.memory_space<vmem>>, %arg3: memref<64x1xi32, #tpu.memory_space<vmem>>, %arg4: memref<1x8x128xf32, #tpu.memory_space<vmem>>, %arg5: memref<1x8x128xf32, #tpu.memory_space<vmem>>) attributes {dimension_semantics = [#tpu.dimension_semantics<parallel>, #tpu.dimension_semantics<arbitrary>], iteration_bounds = array<i64: 1, 1>, scalar_prefetch = 0 : i64, scratch_operands = 1 : i64, tpu.core_type = #tpu.core_type<tc>, window_params = [{transform_indices = @transform_0, window_bounds = array<i64: 64, 32>}, {transform_indices = @transform_1, window_bounds = array<i64: 64, 1>}, {transform_indices = @transform_2, window_bounds = array<i64: 1, 8, 128>}]} {
    %c0_i32 = arith.constant 0 : i32
    %0 = arith.cmpi eq, %arg1, %c0_i32 : i32
    %1 = arith.extui %0 : i1 to i32
    %c0_i32_0 = arith.constant 0 : i32
    %2 = arith.cmpi ne, %1, %c0_i32_0 : i32
    scf.if %2 {
      %cst_18 = arith.constant 0.000000e+00 : f32
      %43 = vector.broadcast %cst_18 : f32 to vector<1x8x128xf32>
      %c0_19 = arith.constant 0 : index
      %c0_20 = arith.constant 0 : index
      %c0_21 = arith.constant 0 : index
      %44 = vector.load %arg5[%c0_19, %c0_20, %c0_21] : memref<1x8x128xf32, #tpu.memory_space<vmem>>, vector<1x8x128xf32>
      tpu.vector_store %arg5[%c0_19, %c0_20, %c0_21], %43 {strides = array<i32>} : memref<1x8x128xf32, #tpu.memory_space<vmem>>, vector<1x8x128xf32>,
    } else {
    }
    %c0 = arith.constant 0 : index
    %c0_1 = arith.constant 0 : index
    %3 = vector.load %arg2[%c0, %c0_1] : memref<64x32xf32, #tpu.memory_space<vmem>>, vector<64x32xf32>
    %c0_2 = arith.constant 0 : index
    %c0_3 = arith.constant 0 : index
    %4 = vector.load %arg3[%c0_2, %c0_3] : memref<64x1xi32, #tpu.memory_space<vmem>>, vector<64x1xi32>
    %cst = arith.constant dense<0xFF800000> : vector<64xf32>
    %5 = vector.multi_reduction <maximumf>, %3, %cst [1] : vector<64x32xf32> to vector<64xf32>
    %6 = vector.shape_cast %5 : vector<64xf32> to vector<64x1xf32>
    %7 = vector.broadcast %6 : vector<64x1xf32> to vector<64x32xf32>
    %8 = arith.subf %3, %7 : vector<64x32xf32>
    %9 = math.exp %8 : vector<64x32xf32>
    %cst_4 = arith.constant dense<0.000000e+00> : vector<64xf32>
    %10 = vector.multi_reduction <add>, %9, %cst_4 [1] : vector<64x32xf32> to vector<64xf32>
    %11 = vector.shape_cast %10 : vector<64xf32> to vector<64x1xf32>
    %12 = math.log %11 : vector<64x1xf32>
    %13 = arith.addf %6, %12 : vector<64x1xf32>
    %14 = tpu.iota {dimensions = array<i32: 1>} : vector<64x32xi32>
    %15 = vector.broadcast %4 : vector<64x1xi32> to vector<64x32xi32>
    %16 = arith.cmpi eq, %14, %15 : vector<64x32xi32>
    %cst_5 = arith.constant 0.000000e+00 : f32
    %17 = vector.broadcast %cst_5 : f32 to vector<64x32xf32>
    %18 = arith.select %16, %3, %17 : vector<64x32xi1>, vector<64x32xf32>
    %cst_6 = arith.constant dense<0.000000e+00> : vector<64xf32>
    %19 = vector.multi_reduction <add>, %18, %cst_6 [1] : vector<64x32xf32> to vector<64xf32>
    %20 = vector.shape_cast %19 : vector<64xf32> to vector<64x1xf32>
    %21 = arith.subf %13, %20 : vector<64x1xf32>
    %c1_i32 = arith.constant 1 : i32
    %22 = arith.muli %arg0, %c1_i32 : i32
    %23 = arith.addi %22, %arg1 : i32
    %c64_i32 = arith.constant 64 : i32
    %24 = arith.muli %23, %c64_i32 : i32
    %25 = tpu.iota {dimensions = array<i32: 0>} : vector<64x1xi32>
    %26 = vector.broadcast %24 : i32 to vector<64x1xi32>
    %27 = arith.addi %26, %25 : vector<64x1xi32>
    %c64_i32_7 = arith.constant 64 : i32
    %28 = vector.broadcast %c64_i32_7 : i32 to vector<64x1xi32>
    %29 = arith.cmpi slt, %27, %28 : vector<64x1xi32>
    %cst_8 = arith.constant 0.000000e+00 : f32
    %30 = vector.broadcast %cst_8 : f32 to vector<64x1xf32>
    %31 = arith.select %29, %21, %30 : vector<64x1xi1>, vector<64x1xf32>
    %c0_9 = arith.constant 0 : index
    %c0_10 = arith.constant 0 : index
    %c0_11 = arith.constant 0 : index
    %32 = vector.load %arg5[%c0_9, %c0_10, %c0_11] : memref<1x8x128xf32, #tpu.memory_space<vmem>>, vector<1x8x128xf32>
    %33 = vector.shape_cast %31 : vector<64x1xf32> to vector<1x64x1xf32>
    %cst_12 = arith.constant dense<0.000000e+00> : vector<1xf32>
    %34 = vector.multi_reduction <add>, %33, %cst_12 [1, 2] : vector<1x64x1xf32> to vector<1xf32>
    %35 = vector.shape_cast %34 : vector<1xf32> to vector<1x1x1xf32>
    %36 = vector.extract %35[0, 0, 0] : f32 from vector<1x1x1xf32>
    %37 = vector.broadcast %36 : f32 to vector<1x8x128xf32>
    %38 = arith.addf %32, %37 : vector<1x8x128xf32>
    %c0_13 = arith.constant 0 : index
    %c0_14 = arith.constant 0 : index
    %c0_15 = arith.constant 0 : index
    %39 = vector.load %arg5[%c0_13, %c0_14, %c0_15] : memref<1x8x128xf32, #tpu.memory_space<vmem>>, vector<1x8x128xf32>
    tpu.vector_store %arg5[%c0_13, %c0_14, %c0_15], %38 {strides = array<i32>} : memref<1x8x128xf32, #tpu.memory_space<vmem>>, vector<1x8x128xf32>,
    %c0_i32_16 = arith.constant 0 : i32
    %40 = arith.cmpi eq, %arg1, %c0_i32_16 : i32
    %41 = arith.extui %40 : i1 to i32
    %c0_i32_17 = arith.constant 0 : i32
    %42 = arith.cmpi ne, %41, %c0_i32_17 : i32
    scf.if %42 {
      %c0_18 = arith.constant 0 : index
      %c0_19 = arith.constant 0 : index
      %c0_20 = arith.constant 0 : index
      %43 = vector.load %arg5[%c0_18, %c0_19, %c0_20] : memref<1x8x128xf32, #tpu.memory_space<vmem>>, vector<1x8x128xf32>
      %c0_21 = arith.constant 0 : index
      %c0_22 = arith.constant 0 : index
      %c0_23 = arith.constant 0 : index
      %44 = vector.load %arg4[%c0_21, %c0_22, %c0_23] : memref<1x8x128xf32, #tpu.memory_space<vmem>>, vector<1x8x128xf32>
      tpu.vector_store %arg4[%c0_21, %c0_22, %c0_23], %43 {strides = array<i32>} : memref<1x8x128xf32, #tpu.memory_space<vmem>>, vector<1x8x128xf32>,
    } else {
    }
    return
  }
  func.func @transform_0(%arg0: i32, %arg1: i32) -> (i32, i32) {
    %c1_i32 = arith.constant 1 : i32
    %0 = arith.muli %arg0, %c1_i32 : i32
    %1 = arith.addi %0, %arg1 : i32
    %c0_i32 = arith.constant 0 : i32
    %2 = arith.minsi %1, %c0_i32 : i32
    %c0_i32_0 = arith.constant 0 : i32
    %c0_i32_1 = arith.constant 0 : i32
    return %2, %c0_i32_0 : i32, i32
  }
  func.func @transform_1(%arg0: i32, %arg1: i32) -> (i32, i32) {
    %c1_i32 = arith.constant 1 : i32
    %0 = arith.muli %arg0, %c1_i32 : i32
    %1 = arith.addi %0, %arg1 : i32
    %c0_i32 = arith.constant 0 : i32
    %2 = arith.minsi %1, %c0_i32 : i32
    %c0_i32_0 = arith.constant 0 : i32
    %c0_i32_1 = arith.constant 0 : i32
    return %2, %c0_i32_0 : i32, i32
  }
  func.func @transform_2(%arg0: i32, %arg1: i32) -> (i32, i32, i32) {
    %c0_i32 = arith.constant 0 : i32
    %c0_i32_0 = arith.constant 0 : i32
    %c0_i32_1 = arith.constant 0 : i32
    return %arg0, %c0_i32, %c0_i32_0 : i32, i32, i32
  }
}

</mosaic_0001>

<llo_original>
// kernel: tpu_custom_call.1
$region0: #{tpu_custom_call.1}
  #allocation0 [shape = 'u32[]', space=smem, size = 0x4, offset = 0x4, fixed_abs, tag = 'smem constant byte address 0x4 - core index']
  #allocation1 [shape = 'u32[144,128]{1,0:T(1,128)}', space=vmem, size = 0x12000, scoped, tag = 'internal scratch']
  #allocation2 [shape = 'f32[1,8,128]{2,1,0:T(8,128)}', space=vmem, size = 0x1000, scoped, tag = 'scratch operand']
  %s0 = inlined_call_operand.vmem [shape: f32[64,32], index: 0, kind: input, shape index: {}]
  %s1 = inlined_call_operand.vmem [shape: s32[64,1], index: 1, kind: input, shape index: {}]
  %s2 = inlined_call_operand.hbm [shape: f32[1,8,128], index: 2, kind: output, shape index: {}]
  %s3 = sld [smem:[#allocation0]]
  $region26: #{tpu_custom_call.1} parent=0
    _
  %s5 = ssub.s32 1, %s3
  %s6 = scalar_select 0, %s5, %s3
  $region1: #{tpu_custom_call.1} parent=0
    #allocation3 [shape = 'u8[4096]{0}', space=vmem, size = 0x1000, scoped, tag = 'output window, operand 0, single buffered']
    #allocation4 [shape = 's32[1]{0}', space=sflag, size = 0x4, scoped, tag = 'scoped memory for tpu_custom_call.1']
    %7 = vsyncpa [#allocation4], 0
    // Predicated region
    $region2: #{tpu_custom_call.1} parent=1 // pred_check
      _
    $region3: #{tpu_custom_call.1} parent=1 // pred_check_branch
      %9 = sbr.rel (0) target = $region5
    $region4: #{tpu_custom_call.1} parent=1 // pred_region
      %s10 = sadd.s32 0, 0
      %p11 = scmp.lt.s32.totalorder %s10, 0
      %s12 = scalar_select %p11, %s10, 0
      %s13 = smul.u32 8, %s12
      %p14 = scmp.lt.s32.totalorder %s13, 7
      %s15 = scalar_select %p14, %s13, 7
      %s16 = smul.addr %s15, 8
      %s17 = scalar_lea.vmem %s0, %s16
      %s18 = sadd.s32 0, 0
      %p19 = scmp.lt.s32.totalorder %s18, 0
      %s20 = scalar_select %p19, %s18, 0
      %s21 = smul.u32 8, %s20
    $region5: #{tpu_custom_call.1} parent=1 // pred_fallthru
      _
    // Predicated region
    $region6: #{tpu_custom_call.1} parent=1 // pred_check
      _
    $region7: #{tpu_custom_call.1} parent=1 // pred_check_branch
      %23 = sbr.rel (0) target = $region9
    $region8: #{tpu_custom_call.1} parent=1 // pred_region
      %s24 = sadd.s32 0, 0
      %p25 = scmp.lt.s32.totalorder %s24, 0
      %s26 = scalar_select %p25, %s24, 0
      %s27 = smul.u32 8, %s26
      %p28 = scmp.lt.s32.totalorder %s27, 7
      %s29 = scalar_select %p28, %s27, 7
      %s30 = smul.addr %s29, 8
      %s31 = scalar_lea.vmem %s1, %s30
      %s32 = sadd.s32 0, 0
      %p33 = scmp.lt.s32.totalorder %s32, 0
      %s34 = scalar_select %p33, %s32, 0
      %s35 = smul.u32 8, %s34
    $region9: #{tpu_custom_call.1} parent=1 // pred_fallthru
      _
    %s36 = sadd.s32 0, 0
    %p37 = scmp.lt.s32.totalorder %s36, 0
    %s38 = scalar_select %p37, %s36, 0
    %s39 = smul.u32 8, %s38
    %p40 = scmp.lt.s32.totalorder %s39, 7
    %s41 = scalar_select %p40, %s39, 7
    %s42 = smul.addr %s41, 8
    %s43 = scalar_lea.vmem %s0, %s42
    %s44 = sadd.s32 0, 0
    %p45 = scmp.lt.s32.totalorder %s44, 0
    %s46 = scalar_select %p45, %s44, 0
    %s47 = smul.u32 8, %s46
    %p48 = scmp.lt.s32.totalorder %s47, 7
    %s49 = scalar_select %p48, %s47, 7
    %s50 = smul.addr %s49, 8
    %s51 = scalar_lea.vmem %s1, %s50
    %s52 = sadd.s32 0, 0
    %p53 = scmp.lt.s32.totalorder %s52, 0
    %s54 = scalar_select %p53, %s52, 0
    %s55 = smul.u32 8, %s54
    %p56 = scmp.lt.s32.totalorder %s55, 7
    %s57 = scalar_select %p56, %s55, 7
    %s58 = smul.addr %s57, 8
    %s59 = scalar_lea.vmem %s0, %s58
    %s60 = sadd.s32 0, 0
    %p61 = scmp.lt.s32.totalorder %s60, 0
    %s62 = scalar_select %p61, %s60, 0
    %s63 = smul.u32 8, %s62
    %s64 = sadd.s32 0, 0
    %p65 = scmp.lt.s32.totalorder %s64, 0
    %s66 = scalar_select %p65, %s64, 0
    %s67 = smul.u32 8, %s66
    %p68 = scmp.lt.s32.totalorder %s67, 7
    %s69 = scalar_select %p68, %s67, 7
    %s70 = smul.addr %s69, 8
    %s71 = scalar_lea.vmem %s1, %s70
    %s72 = sadd.s32 0, 0
    %p73 = scmp.lt.s32.totalorder %s72, 0
    %s74 = scalar_select %p73, %s72, 0
    %s75 = smul.u32 8, %s74
    %p76 = scmp.eq.s32.totalorder 0, 0
    // Predicated region
    $region10: #{tpu_custom_call.1} parent=1 // pred_check
      %p77 = pneg %p76
    $region11: #{tpu_custom_call.1} parent=1 // pred_check_branch
      %79 = sbr.rel (%p77) target = $region13
    $region12: #{tpu_custom_call.1} parent=1 // pred_region
      %80 = vst [vmem:[#allocation2] sm:$0xff] 0.0
    $region13: #{tpu_custom_call.1} parent=1 // pred_fallthru
      _
    %v81 = vld [vmem:[%s59] sm:$0xff]
    %v82 = vld [vmem:[%s59 + $0x8] sm:$0xff]
    %v83 = vld [vmem:[%s59 + $0x10] sm:$0xff]
    %v84 = vld [vmem:[%s59 + $0x18] sm:$0xff]
    %v85 = vld [vmem:[%s59 + $0x20] sm:$0xff]
    %v86 = vld [vmem:[%s59 + $0x28] sm:$0xff]
    %v87 = vld [vmem:[%s59 + $0x30] sm:$0xff]
    %v88 = vld [vmem:[%s59 + $0x38] sm:$0xff]
    %v89 = vld [vmem:[%s71] sm:$0xff]
    %v90 = vld [vmem:[%s71 + $0x8] sm:$0xff]
    %v91 = vld [vmem:[%s71 + $0x10] sm:$0xff]
    %v92 = vld [vmem:[%s71 + $0x18] sm:$0xff]
    %v93 = vld [vmem:[%s71 + $0x20] sm:$0xff]
    %v94 = vld [vmem:[%s71 + $0x28] sm:$0xff]
    %v95 = vld [vmem:[%s71 + $0x30] sm:$0xff]
    %v96 = vld [vmem:[%s71 + $0x38] sm:$0xff]
    %vm97 = vcmask 261120
    %v98 = vsel %vm97, %v81, -inf
    %99 = vmax.xlane.f32.xlu0 %v98
    %v100 = vpop.xlane.xlu0 %99
    %v101 = vsel %vm97, %v82, -inf
    %102 = vmax.xlane.f32.xlu0 %v101
    %v103 = vpop.xlane.xlu0 %102
    %v104 = vsel %vm97, %v83, -inf
    %105 = vmax.xlane.f32.xlu0 %v104
    %v106 = vpop.xlane.xlu0 %105
    %v107 = vsel %vm97, %v84, -inf
    %108 = vmax.xlane.f32.xlu0 %v107
    %v109 = vpop.xlane.xlu0 %108
    %v110 = vsel %vm97, %v85, -inf
    %111 = vmax.xlane.f32.xlu0 %v110
    %v112 = vpop.xlane.xlu0 %111
    %v113 = vsel %vm97, %v86, -inf
    %114 = vmax.xlane.f32.xlu0 %v113
    %v115 = vpop.xlane.xlu0 %114
    %v116 = vsel %vm97, %v87, -inf
    %117 = vmax.xlane.f32.xlu0 %v116
    %v118 = vpop.xlane.xlu0 %117
    %v119 = vsel %vm97, %v88, -inf
    %120 = vmax.xlane.f32.xlu0 %v119
    %v121 = vpop.xlane.xlu0 %120
    %v122 = vsub.f32 %v81, %v100
    %v123 = vsub.f32 %v82, %v103
    %v124 = vsub.f32 %v83, %v106
    %v125 = vsub.f32 %v84, %v109
    %v126 = vsub.f32 %v85, %v112
    %v127 = vsub.f32 %v86, %v115
    %v128 = vsub.f32 %v87, %v118
    %v129 = vsub.f32 %v88, %v121
    %v130 = vmul.f32 %v122, 1.442695
    %v131 = vpow.pop %v130
    %v132 = vmul.f32 %v123, 1.442695
    %v133 = vpow.pop %v132
    %v134 = vmul.f32 %v124, 1.442695
    %v135 = vpow.pop %v134
    %v136 = vmul.f32 %v125, 1.442695
    %v137 = vpow.pop %v136
    %v138 = vmul.f32 %v126, 1.442695
    %v139 = vpow.pop %v138
    %v140 = vmul.f32 %v127, 1.442695
    %v141 = vpow.pop %v140
    %v142 = vmul.f32 %v128, 1.442695
    %v143 = vpow.pop %v142
    %v144 = vmul.f32 %v129, 1.442695
    %v145 = vpow.pop %v144
    %v146 = vsel %vm97, %v131, 0.0
    %147 = vadd.xlane.f32.xlu0 %v146
    %v148 = vpop.xlane.xlu0 %147
    %v149 = vsel %vm97, %v133, 0.0
    %150 = vadd.xlane.f32.xlu0 %v149
    %v151 = vpop.xlane.xlu0 %150
    %v152 = vsel %vm97, %v135, 0.0
    %153 = vadd.xlane.f32.xlu0 %v152
    %v154 = vpop.xlane.xlu0 %153
    %v155 = vsel %vm97, %v137, 0.0
    %156 = vadd.xlane.f32.xlu0 %v155
    %v157 = vpop.xlane.xlu0 %156
    %v158 = vsel %vm97, %v139, 0.0
    %159 = vadd.xlane.f32.xlu0 %v158
    %v160 = vpop.xlane.xlu0 %159
    %v161 = vsel %vm97, %v141, 0.0
    %162 = vadd.xlane.f32.xlu0 %v161
    %v163 = vpop.xlane.xlu0 %162
    %v164 = vsel %vm97, %v143, 0.0
    %165 = vadd.xlane.f32.xlu0 %v164
    %v166 = vpop.xlane.xlu0 %165
    %v167 = vsel %vm97, %v145, 0.0
    %168 = vadd.xlane.f32.xlu0 %v167
    %v169 = vpop.xlane.xlu0 %168
    %v170 = vlog2.pop %v148
    %v171 = vmul.f32 %v170, 0.6931472
    %v172 = vlog2.pop %v151
    %v173 = vmul.f32 %v172, 0.6931472
    %v174 = vlog2.pop %v154
    %v175 = vmul.f32 %v174, 0.6931472
    %v176 = vlog2.pop %v157
    %v177 = vmul.f32 %v176, 0.6931472
    %v178 = vlog2.pop %v160
    %v179 = vmul.f32 %v178, 0.6931472
    %v180 = vlog2.pop %v163
    %v181 = vmul.f32 %v180, 0.6931472
    %v182 = vlog2.pop %v166
    %v183 = vmul.f32 %v182, 0.6931472
    %v184 = vlog2.pop %v169
    %v185 = vmul.f32 %v184, 0.6931472
    %v186 = vadd.f32 %v100, %v171
    %v187 = vadd.f32 %v103, %v173
    %v188 = vadd.f32 %v106, %v175
    %v189 = vadd.f32 %v109, %v177
    %v190 = vadd.f32 %v112, %v179
    %v191 = vadd.f32 %v115, %v181
    %v192 = vadd.f32 %v118, %v183
    %v193 = vadd.f32 %v121, %v185
    %v194 = vlaneseq
    %v195 = vand.u32 %v194, 127
    %196 = vset.pattern.permute.xlu0 0
    %197 = vperm.xlu0 %196, %v89
    %v198 = vpop.permute.xlu0 %197
    %199 = vset.pattern.permute.xlu0 0
    %200 = vperm.xlu0 %199, %v90
    %v201 = vpop.permute.xlu0 %200
    %202 = vset.pattern.permute.xlu0 0
    %203 = vperm.xlu0 %202, %v91
    %v204 = vpop.permute.xlu0 %203
    %205 = vset.pattern.permute.xlu0 0
    %206 = vperm.xlu0 %205, %v92
    %v207 = vpop.permute.xlu0 %206
    %208 = vset.pattern.permute.xlu0 0
    %209 = vperm.xlu0 %208, %v93
    %v210 = vpop.permute.xlu0 %209
    %211 = vset.pattern.permute.xlu0 0
    %212 = vperm.xlu0 %211, %v94
    %v213 = vpop.permute.xlu0 %212
    %214 = vset.pattern.permute.xlu0 0
    %215 = vperm.xlu0 %214, %v95
    %v216 = vpop.permute.xlu0 %215
    %217 = vset.pattern.permute.xlu0 0
    %218 = vperm.xlu0 %217, %v96
    %v219 = vpop.permute.xlu0 %218
    %vm220 = vcmp.eq.s32.totalorder %v195, %v198
    %vm221 = vcmp.eq.s32.totalorder %v195, %v201
    %vm222 = vcmp.eq.s32.totalorder %v195, %v204
    %vm223 = vcmp.eq.s32.totalorder %v195, %v207
    %vm224 = vcmp.eq.s32.totalorder %v195, %v210
    %vm225 = vcmp.eq.s32.totalorder %v195, %v213
    %vm226 = vcmp.eq.s32.totalorder %v195, %v216
    %vm227 = vcmp.eq.s32.totalorder %v195, %v219
    %v228 = vsel %vm220, %v81, 0.0
    %v229 = vsel %vm221, %v82, 0.0
    %v230 = vsel %vm222, %v83, 0.0
    %v231 = vsel %vm223, %v84, 0.0
    %v232 = vsel %vm224, %v85, 0.0
    %v233 = vsel %vm225, %v86, 0.0
    %v234 = vsel %vm226, %v87, 0.0
    %v235 = vsel %vm227, %v88, 0.0
    %v236 = vsel %vm97, %v228, 0.0
    %237 = vadd.xlane.f32.xlu0 %v236
    %v238 = vpop.xlane.xlu0 %237
    %v239 = vsel %vm97, %v229, 0.0
    %240 = vadd.xlane.f32.xlu0 %v239
    %v241 = vpop.xlane.xlu0 %240
    %v242 = vsel %vm97, %v230, 0.0
    %243 = vadd.xlane.f32.xlu0 %v242
    %v244 = vpop.xlane.xlu0 %243
    %v245 = vsel %vm97, %v231, 0.0
    %246 = vadd.xlane.f32.xlu0 %v245
    %v247 = vpop.xlane.xlu0 %246
    %v248 = vsel %vm97, %v232, 0.0
    %249 = vadd.xlane.f32.xlu0 %v248
    %v250 = vpop.xlane.xlu0 %249
    %v251 = vsel %vm97, %v233, 0.0
    %252 = vadd.xlane.f32.xlu0 %v251
    %v253 = vpop.xlane.xlu0 %252
    %v254 = vsel %vm97, %v234, 0.0
    %255 = vadd.xlane.f32.xlu0 %v254
    %v256 = vpop.xlane.xlu0 %255
    %v257 = vsel %vm97, %v235, 0.0
    %258 = vadd.xlane.f32.xlu0 %v257
    %v259 = vpop.xlane.xlu0 %258
    %v260 = vsub.f32 %v186, %v238
    %v261 = vsub.f32 %v187, %v241
    %v262 = vsub.f32 %v188, %v244
    %v263 = vsub.f32 %v189, %v247
    %v264 = vsub.f32 %v190, %v250
    %v265 = vsub.f32 %v191, %v253
    %v266 = vsub.f32 %v192, %v256
    %v267 = vsub.f32 %v193, %v259
    %s268 = sadd.s32 0, 0
    %s269 = smul.u32 %s268, 64
    %v270 = vlaneseq
    %v271 = vshrl.u32 %v270, 7
    %v272 = vadd.s32 %v271, 8
    %v273 = vadd.s32 %v271, 16
    %v274 = vadd.s32 %v271, 24
    %v275 = vadd.s32 %v271, 32
    %v276 = vadd.s32 %v271, 40
    %v277 = vadd.s32 %v271, 48
    %v278 = vadd.s32 %v271, 56
    %v279 = vstv %s269
    %v280 = vadd.s32 %v279, %v271
    %v281 = vadd.s32 %v279, %v272
    %v282 = vadd.s32 %v279, %v273
    %v283 = vadd.s32 %v279, %v274
    %v284 = vadd.s32 %v279, %v275
    %v285 = vadd.s32 %v279, %v276
    %v286 = vadd.s32 %v279, %v277
    %v287 = vadd.s32 %v279, %v278
    %vm288 = vcmp.lt.s32.totalorder %v280, 64
    %vm289 = vcmp.lt.s32.totalorder %v281, 64
    %vm290 = vcmp.lt.s32.totalorder %v282, 64
    %vm291 = vcmp.lt.s32.totalorder %v283, 64
    %vm292 = vcmp.lt.s32.totalorder %v284, 64
    %vm293 = vcmp.lt.s32.totalorder %v285, 64
    %vm294 = vcmp.lt.s32.totalorder %v286, 64
    %vm295 = vcmp.lt.s32.totalorder %v287, 64
    %v296 = vsel %vm288, %v260, 0.0
    %v297 = vsel %vm289, %v261, 0.0
    %v298 = vsel %vm290, %v262, 0.0
    %v299 = vsel %vm291, %v263, 0.0
    %v300 = vsel %vm292, %v264, 0.0
    %v301 = vsel %vm293, %v265, 0.0
    %v302 = vsel %vm294, %v266, 0.0
    %v303 = vsel %vm295, %v267, 0.0
    %v304 = vld [vmem:[#allocation2] sm:$0xff]
    %vm305 = vcmask 7168
    %v306 = vsel %vm305, %v296, 0.0
    %v307 = vsel %vm305, %v297, 0.0
    %v308 = vadd.f32 %v306, %v307
    %v309 = vsel %vm305, %v298, 0.0
    %v310 = vadd.f32 %v308, %v309
    %v311 = vsel %vm305, %v299, 0.0
    %v312 = vadd.f32 %v310, %v311
    %v313 = vsel %vm305, %v300, 0.0
    %v314 = vadd.f32 %v312, %v313
    %v315 = vsel %vm305, %v301, 0.0
    %v316 = vadd.f32 %v314, %v315
    %v317 = vsel %vm305, %v302, 0.0
    %v318 = vadd.f32 %v316, %v317
    %v319 = vsel %vm305, %v303, 0.0
    %v320 = vadd.f32 %v318, %v319
    %321 = vadd.xlane.f32.xlu0 %v320
    %v322 = vpop.xlane.xlu0 %321
    %v323 = vrot.slane %v322, 4
    %v324 = vadd.f32 %v322, %v323
    %v325 = vrot.slane %v324, 2
    %v326 = vadd.f32 %v324, %v325
    %v327 = vrot.slane %v326, 1
    %v328 = vadd.f32 %v326, %v327
    %s329 = vtos %v328
    %v330 = vstv %s329
    %v331 = vadd.f32 %v304, %v330
    %332 = vst [vmem:[#allocation2] sm:$0xff] %v331
    // Predicated region
    $region14: #{tpu_custom_call.1} parent=1 // pred_check
      %p333 = pneg %p76
    $region15: #{tpu_custom_call.1} parent=1 // pred_check_branch
      %335 = sbr.rel (%p333) target = $region17
    $region16: #{tpu_custom_call.1} parent=1 // pred_region
      %v336 = vld [vmem:[#allocation2] sm:$0xff]
      %337 = vst [vmem:[#allocation3] sm:$0xff] %v336
    $region17: #{tpu_custom_call.1} parent=1 // pred_fallthru
      _
    // Predicated region
    $region18: #{tpu_custom_call.1} parent=1 // pred_check
      _
    $region19: #{tpu_custom_call.1} parent=1 // pred_check_branch
      %339 = sbr.rel (0) target = $region21
    $region20: #{tpu_custom_call.1} parent=1 // pred_region
      %s341 = ssub.s32 128, 128
      %342 = vsyncadd [#allocation4], %s341
      %s344 = sshll.u32 [#allocation3], 4
      %s345 = int_to_ptr.vmem [resolvable:$true] %s344
      %347 = dma.vmem_to_hbm [thread:$0]  %s345, 128, %s2, [#allocation4]
    $region21: #{tpu_custom_call.1} parent=1 // pred_fallthru
      _
    // Predicated region
    $region22: #{tpu_custom_call.1} parent=1 // pred_check
      _
    $region23: #{tpu_custom_call.1} parent=1 // pred_check_branch
      %349 = sbr.rel (0) target = $region25
    $region24: #{tpu_custom_call.1} parent=1 // pred_region
      %350 = dma.done [#allocation4], 128
    $region25: #{tpu_custom_call.1} parent=1 // pred_fallthru
      _
    %351 = vsyncpa [#allocation4], 1

</llo_original>
